<compile_context>
chip_gen: v7x
topology: tpu7x:2x2x1
jax: 0.10.0
libtpu: 0.0.40
codegen_flags: <defaults>
</compile_context>

<pallas_src>
import jax
import jax.numpy as jnp
from jax.experimental import pallas as pl
from jax.experimental.pallas import tpu as pltpu


def _state_loss_kernel(re_ref, im_ref, tgt_ref, out_ref):
    # elementwise: (re - tgt)^2 + im^2   (VPU only; kernel is DMA-bound)
    d = re_ref[...] - tgt_ref[...]
    im = im_ref[...]
    out_ref[...] = d * d + im * im


_LANE = 128
# ~1 MiB per block buffer -> ~8 MiB live VMEM with double-buffering of
# 3 inputs + 1 output; fits default scoped VMEM on v5e/v6e/v7x.
_TARGET_BLOCK_BYTES = 1 << 20


def _round_up(x: int, m: int) -> int:
    return ((x + m - 1) // m) * m


def _choose_cols(total: int):
    """Pick a lane-dense column count (multiple of 128) and tail padding."""
    for c in (4096, 2048, 1024, 512, 256, 128):
        if total % c == 0:
            return c, 0
    c = 1024
    return c, (-total) % c


def state_loss(inp_complex: jax.Array, target: jax.Array) -> jax.Array:
    """Pallas implementation of StateLoss.forward.

    inp_complex: complex array (any shape)
    target:      real array, same shape
    returns:     float32 array, same shape
    """
    assert jnp.iscomplexobj(inp_complex), "input must be complex"
    assert not jnp.iscomplexobj(target), "target must be real"
    assert inp_complex.shape == target.shape

    orig_shape = inp_complex.shape

    # TODO(synk): fuse the complex->(re, im) deinterleave into the kernel
    # (bitcast + lane-strided/even-odd gather) to halve HBM traffic; Mosaic
    # does not reliably lower lane-strided loads, so the split stays in XLA.
    re = jnp.real(inp_complex).astype(jnp.float32).reshape(-1)
    im = jnp.imag(inp_complex).astype(jnp.float32).reshape(-1)
    tgt = target.astype(jnp.float32).reshape(-1)

    total = re.size
    if total == 0:
        return jnp.zeros(orig_shape, jnp.float32)

    cols, pad = _choose_cols(total)
    if pad:
        re = jnp.pad(re, (0, pad))
        im = jnp.pad(im, (0, pad))
        tgt = jnp.pad(tgt, (0, pad))
    rows = (total + pad) // cols

    re2 = re.reshape(rows, cols)
    im2 = im.reshape(rows, cols)
    tgt2 = tgt.reshape(rows, cols)

    # ~1 MiB f32 blocks; shrink for small inputs, keep rows a multiple of 8.
    tile_rows = max(8, _TARGET_BLOCK_BYTES // (4 * cols))
    tile_rows = min(tile_rows, _round_up(rows, 8))
    grid = (pl.cdiv(rows, tile_rows),)

    spec = pl.BlockSpec((tile_rows, cols), lambda i: (i, 0))

    out2 = pl.pallas_call(
        _state_loss_kernel,
        out_shape=jax.ShapeDtypeStruct((rows, cols), jnp.float32),
        grid_spec=pltpu.PrefetchScalarGridSpec(
            num_scalar_prefetch=0,
            grid=grid,
            in_specs=[spec, spec, spec],
            out_specs=spec,
        ),
        compiler_params=pltpu.CompilerParams(
            dimension_semantics=("parallel",),
        ),
    )(re2, im2, tgt2)

    out_flat = out2.reshape(-1)
    if pad:
        out_flat = out_flat[:total]
    return out_flat.reshape(orig_shape)


def _reference(inp_complex, target):
    return (jnp.real(inp_complex) - target) ** 2 + jnp.imag(inp_complex) ** 2


def _make_inputs(key, shape):
    k_re, k_im, k_tgt = jax.random.split(key, 3)
    x_re = jax.random.normal(k_re, shape, dtype=jnp.float32)
    x_im = jax.random.normal(k_im, shape, dtype=jnp.float32)
    x = x_re + 1j * x_im  # complex64
    target = jax.random.normal(k_tgt, shape, dtype=jnp.float32)
    return x, target


if __name__ == "__main__":
    key = jax.random.PRNGKey(0)
    k0, k1, k2 = jax.random.split(key, 3)

    # Primary small shape consistent with an elementwise loss over a state grid.
    shape = (2, 4, 16, 16)
    x, target = _make_inputs(k0, shape)
    out = jax.block_until_ready(state_loss(x, target))
    ref = _reference(x, target)
    assert out.shape == shape and out.dtype == jnp.float32
    assert jnp.allclose(out, ref, atol=1e-5, rtol=1e-5), "mismatch vs reference"

    # Odd element count -> exercises the pad/crop path (no giant-block fallback).
    shape_odd = (3, 5, 7)
    x_o, t_o = _make_inputs(k1, shape_odd)
    out_o = jax.block_until_ready(state_loss(x_o, t_o))
    assert jnp.allclose(out_o, _reference(x_o, t_o), atol=1e-5, rtol=1e-5)

    # Medium shape -> exercises a multi-step pipelined grid.
    shape_med = (16, 128, 256)
    x_m, t_m = _make_inputs(k2, shape_med)
    out_m = jax.block_until_ready(state_loss(x_m, t_m))
    assert jnp.allclose(out_m, _reference(x_m, t_m), atol=1e-5, rtol=1e-5)

    print("KERNEL_OK")
</pallas_src>

<mosaic_0001>
module attributes {stable_mosaic.version = 11 : i64} {
  func.func @_state_loss_kernel(%arg0: i32, %arg1: memref<8x2048xf32, #tpu.memory_space<vmem>>, %arg2: memref<8x2048xf32, #tpu.memory_space<vmem>>, %arg3: memref<8x2048xf32, #tpu.memory_space<vmem>>, %arg4: memref<8x2048xf32, #tpu.memory_space<vmem>>) attributes {dimension_semantics = [#tpu.dimension_semantics<parallel>], iteration_bounds = array<i64: 1>, scalar_prefetch = 0 : i64, scratch_operands = 0 : i64, tpu.core_type = #tpu.core_type<tc>, window_params = [{transform_indices = @transform_0, window_bounds = array<i64: 8, 2048>}, {transform_indices = @transform_1, window_bounds = array<i64: 8, 2048>}, {transform_indices = @transform_2, window_bounds = array<i64: 8, 2048>}, {transform_indices = @transform_3, window_bounds = array<i64: 8, 2048>}]} {
    %c0 = arith.constant 0 : index
    %c0_0 = arith.constant 0 : index
    %0 = vector.load %arg1[%c0, %c0_0] : memref<8x2048xf32, #tpu.memory_space<vmem>>, vector<8x2048xf32>
    %c0_1 = arith.constant 0 : index
    %c0_2 = arith.constant 0 : index
    %1 = vector.load %arg3[%c0_1, %c0_2] : memref<8x2048xf32, #tpu.memory_space<vmem>>, vector<8x2048xf32>
    %2 = arith.subf %0, %1 : vector<8x2048xf32>
    %c0_3 = arith.constant 0 : index
    %c0_4 = arith.constant 0 : index
    %3 = vector.load %arg2[%c0_3, %c0_4] : memref<8x2048xf32, #tpu.memory_space<vmem>>, vector<8x2048xf32>
    %4 = arith.mulf %2, %2 : vector<8x2048xf32>
    %5 = arith.mulf %3, %3 : vector<8x2048xf32>
    %6 = arith.addf %4, %5 : vector<8x2048xf32>
    %c0_5 = arith.constant 0 : index
    %c0_6 = arith.constant 0 : index
    %7 = vector.load %arg4[%c0_5, %c0_6] : memref<8x2048xf32, #tpu.memory_space<vmem>>, vector<8x2048xf32>
    tpu.vector_store %arg4[%c0_5, %c0_6], %6 {strides = array<i32>} : memref<8x2048xf32, #tpu.memory_space<vmem>>, vector<8x2048xf32>,
    return
  }
  func.func @transform_0(%arg0: i32) -> (i32, i32) {
    %c0_i32 = arith.constant 0 : i32
    %c0_i32_0 = arith.constant 0 : i32
    return %arg0, %c0_i32 : i32, i32
  }
  func.func @transform_1(%arg0: i32) -> (i32, i32) {
    %c0_i32 = arith.constant 0 : i32
    %c0_i32_0 = arith.constant 0 : i32
    return %arg0, %c0_i32 : i32, i32
  }
  func.func @transform_2(%arg0: i32) -> (i32, i32) {
    %c0_i32 = arith.constant 0 : i32
    %c0_i32_0 = arith.constant 0 : i32
    return %arg0, %c0_i32 : i32, i32
  }
  func.func @transform_3(%arg0: i32) -> (i32, i32) {
    %c0_i32 = arith.constant 0 : i32
    %c0_i32_0 = arith.constant 0 : i32
    return %arg0, %c0_i32 : i32, i32
  }
}

</mosaic_0001>

<llo_original>
// kernel: tpu_custom_call.1
$region0: #{tpu_custom_call.1}
  #allocation0 [shape = 'u32[]', space=smem, size = 0x4, offset = 0x4, fixed_abs, tag = 'smem constant byte address 0x4 - core index']
  #allocation1 [shape = 'u32[144,128]{1,0:T(1,128)}', space=vmem, size = 0x12000, scoped, tag = 'internal scratch']
  %s0 = inlined_call_operand.hbm [shape: f32[1,2048], index: 0, kind: input, shape index: {}]
  %s1 = inlined_call_operand.hbm [shape: f32[1,2048], index: 1, kind: input, shape index: {}]
  %s2 = inlined_call_operand.hbm [shape: f32[1,2048], index: 2, kind: input, shape index: {}]
  %s3 = inlined_call_operand.hbm [shape: f32[1,2048], index: 3, kind: output, shape index: {}]
  %s4 = sld [smem:[#allocation0]]
  $region34: #{tpu_custom_call.1} parent=0
    _
  %s6 = ssub.s32 1, %s4
  %s7 = scalar_select 0, %s6, %s4
  $region1: #{tpu_custom_call.1} parent=0
    #allocation2 [shape = 'u8[65536]{0}', space=vmem, size = 0x10000, scoped, tag = 'input window, operand 0, single buffered']
    #allocation3 [shape = 's32[1]{0}', space=sflag, size = 0x4, scoped, tag = 'scoped memory for tpu_custom_call.1']
    #allocation4 [shape = 's32[1]{0}', space=sflag, size = 0x4, scoped, tag = 'scoped memory for tpu_custom_call.1']
    #allocation5 [shape = 'u8[65536]{0}', space=vmem, size = 0x10000, scoped, tag = 'input window, operand 1, single buffered']
    #allocation6 [shape = 's32[1]{0}', space=sflag, size = 0x4, scoped, tag = 'scoped memory for tpu_custom_call.1']
    #allocation7 [shape = 'u8[65536]{0}', space=vmem, size = 0x10000, scoped, tag = 'input window, operand 2, single buffered']
    #allocation8 [shape = 'u8[65536]{0}', space=vmem, size = 0x10000, scoped, tag = 'output window, operand 0, single buffered']
    %8 = vsyncpa [#allocation3], 0
    %9 = vsyncpa [#allocation6], 0
    %10 = vsyncpa [#allocation4], 0
    // Predicated region
    $region2: #{tpu_custom_call.1} parent=1 // pred_check
      _
    $region3: #{tpu_custom_call.1} parent=1 // pred_check_branch
      %12 = sbr.rel (0) target = $region5
    $region4: #{tpu_custom_call.1} parent=1 // pred_region
      %s14 = ssub.s32 2048, 256
      %15 = vsyncadd [#allocation3], %s14
      %s16 = sshll.u32 [#allocation2], 4
      %s17 = int_to_ptr.vmem [resolvable:$true] %s16
      %22 = dma.hbm_to_vmem [thread:$0]  %s0, 256, %s17, [#allocation3], 256, 256, 16
    $region5: #{tpu_custom_call.1} parent=1 // pred_fallthru
      _
    // Predicated region
    $region6: #{tpu_custom_call.1} parent=1 // pred_check
      _
    $region7: #{tpu_custom_call.1} parent=1 // pred_check_branch
      %24 = sbr.rel (0) target = $region9
    $region8: #{tpu_custom_call.1} parent=1 // pred_region
      %s26 = ssub.s32 2048, 256
      %27 = vsyncadd [#allocation6], %s26
      %s28 = sshll.u32 [#allocation5], 4
      %s29 = int_to_ptr.vmem [resolvable:$true] %s28
      %34 = dma.hbm_to_vmem [thread:$0]  %s1, 256, %s29, [#allocation6], 256, 256, 16
    $region9: #{tpu_custom_call.1} parent=1 // pred_fallthru
      _
    // Predicated region
    $region10: #{tpu_custom_call.1} parent=1 // pred_check
      _
    $region11: #{tpu_custom_call.1} parent=1 // pred_check_branch
      %36 = sbr.rel (0) target = $region13
    $region12: #{tpu_custom_call.1} parent=1 // pred_region
      %s38 = ssub.s32 2048, 256
      %39 = vsyncadd [#allocation6], %s38
      %s40 = sshll.u32 [#allocation7], 4
      %s41 = int_to_ptr.vmem [resolvable:$true] %s40
      %46 = dma.hbm_to_vmem [thread:$0]  %s2, 256, %s41, [#allocation6], 256, 256, 16
    $region13: #{tpu_custom_call.1} parent=1 // pred_fallthru
      _
    // Predicated region
    $region14: #{tpu_custom_call.1} parent=1 // pred_check
      _
    $region15: #{tpu_custom_call.1} parent=1 // pred_check_branch
      %48 = sbr.rel (0) target = $region17
    $region16: #{tpu_custom_call.1} parent=1 // pred_region
      %49 = dma.done [#allocation3], 2048
    $region17: #{tpu_custom_call.1} parent=1 // pred_fallthru
      _
    // Predicated region
    $region18: #{tpu_custom_call.1} parent=1 // pred_check
      _
    $region19: #{tpu_custom_call.1} parent=1 // pred_check_branch
      %51 = sbr.rel (0) target = $region21
    $region20: #{tpu_custom_call.1} parent=1 // pred_region
      %52 = dma.done [#allocation6], 2048
    $region21: #{tpu_custom_call.1} parent=1 // pred_fallthru
      _
    // Predicated region
    $region22: #{tpu_custom_call.1} parent=1 // pred_check
      _
    $region23: #{tpu_custom_call.1} parent=1 // pred_check_branch
      %54 = sbr.rel (0) target = $region25
    $region24: #{tpu_custom_call.1} parent=1 // pred_region
      %55 = dma.done [#allocation6], 2048
    $region25: #{tpu_custom_call.1} parent=1 // pred_fallthru
      _
    %v56 = vld [vmem:[#allocation2] sm:$0xff]
    %v57 = vld [vmem:[#allocation2 + $0x8] sm:$0xff]
    %v58 = vld [vmem:[#allocation2 + $0x10] sm:$0xff]
    %v59 = vld [vmem:[#allocation2 + $0x18] sm:$0xff]
    %v60 = vld [vmem:[#allocation2 + $0x20] sm:$0xff]
    %v61 = vld [vmem:[#allocation2 + $0x28] sm:$0xff]
    %v62 = vld [vmem:[#allocation2 + $0x30] sm:$0xff]
    %v63 = vld [vmem:[#allocation2 + $0x38] sm:$0xff]
    %v64 = vld [vmem:[#allocation2 + $0x40] sm:$0xff]
    %v65 = vld [vmem:[#allocation2 + $0x48] sm:$0xff]
    %v66 = vld [vmem:[#allocation2 + $0x50] sm:$0xff]
    %v67 = vld [vmem:[#allocation2 + $0x58] sm:$0xff]
    %v68 = vld [vmem:[#allocation2 + $0x60] sm:$0xff]
    %v69 = vld [vmem:[#allocation2 + $0x68] sm:$0xff]
    %v70 = vld [vmem:[#allocation2 + $0x70] sm:$0xff]
    %v71 = vld [vmem:[#allocation2 + $0x78] sm:$0xff]
    %v72 = vld [vmem:[#allocation7] sm:$0xff]
    %v73 = vld [vmem:[#allocation7 + $0x8] sm:$0xff]
    %v74 = vld [vmem:[#allocation7 + $0x10] sm:$0xff]
    %v75 = vld [vmem:[#allocation7 + $0x18] sm:$0xff]
    %v76 = vld [vmem:[#allocation7 + $0x20] sm:$0xff]
    %v77 = vld [vmem:[#allocation7 + $0x28] sm:$0xff]
    %v78 = vld [vmem:[#allocation7 + $0x30] sm:$0xff]
    %v79 = vld [vmem:[#allocation7 + $0x38] sm:$0xff]
    %v80 = vld [vmem:[#allocation7 + $0x40] sm:$0xff]
    %v81 = vld [vmem:[#allocation7 + $0x48] sm:$0xff]
    %v82 = vld [vmem:[#allocation7 + $0x50] sm:$0xff]
    %v83 = vld [vmem:[#allocation7 + $0x58] sm:$0xff]
    %v84 = vld [vmem:[#allocation7 + $0x60] sm:$0xff]
    %v85 = vld [vmem:[#allocation7 + $0x68] sm:$0xff]
    %v86 = vld [vmem:[#allocation7 + $0x70] sm:$0xff]
    %v87 = vld [vmem:[#allocation7 + $0x78] sm:$0xff]
    %v88 = vsub.f32 %v56, %v72
    %v89 = vsub.f32 %v57, %v73
    %v90 = vsub.f32 %v58, %v74
    %v91 = vsub.f32 %v59, %v75
    %v92 = vsub.f32 %v60, %v76
    %v93 = vsub.f32 %v61, %v77
    %v94 = vsub.f32 %v62, %v78
    %v95 = vsub.f32 %v63, %v79
    %v96 = vsub.f32 %v64, %v80
    %v97 = vsub.f32 %v65, %v81
    %v98 = vsub.f32 %v66, %v82
    %v99 = vsub.f32 %v67, %v83
    %v100 = vsub.f32 %v68, %v84
    %v101 = vsub.f32 %v69, %v85
    %v102 = vsub.f32 %v70, %v86
    %v103 = vsub.f32 %v71, %v87
    %v104 = vld [vmem:[#allocation5] sm:$0xff]
    %v105 = vld [vmem:[#allocation5 + $0x8] sm:$0xff]
    %v106 = vld [vmem:[#allocation5 + $0x10] sm:$0xff]
    %v107 = vld [vmem:[#allocation5 + $0x18] sm:$0xff]
    %v108 = vld [vmem:[#allocation5 + $0x20] sm:$0xff]
    %v109 = vld [vmem:[#allocation5 + $0x28] sm:$0xff]
    %v110 = vld [vmem:[#allocation5 + $0x30] sm:$0xff]
    %v111 = vld [vmem:[#allocation5 + $0x38] sm:$0xff]
    %v112 = vld [vmem:[#allocation5 + $0x40] sm:$0xff]
    %v113 = vld [vmem:[#allocation5 + $0x48] sm:$0xff]
    %v114 = vld [vmem:[#allocation5 + $0x50] sm:$0xff]
    %v115 = vld [vmem:[#allocation5 + $0x58] sm:$0xff]
    %v116 = vld [vmem:[#allocation5 + $0x60] sm:$0xff]
    %v117 = vld [vmem:[#allocation5 + $0x68] sm:$0xff]
    %v118 = vld [vmem:[#allocation5 + $0x70] sm:$0xff]
    %v119 = vld [vmem:[#allocation5 + $0x78] sm:$0xff]
    %v120 = vmul.f32 %v88, %v88
    %v121 = vmul.f32 %v89, %v89
    %v122 = vmul.f32 %v90, %v90
    %v123 = vmul.f32 %v91, %v91
    %v124 = vmul.f32 %v92, %v92
    %v125 = vmul.f32 %v93, %v93
    %v126 = vmul.f32 %v94, %v94
    %v127 = vmul.f32 %v95, %v95
    %v128 = vmul.f32 %v96, %v96
    %v129 = vmul.f32 %v97, %v97
    %v130 = vmul.f32 %v98, %v98
    %v131 = vmul.f32 %v99, %v99
    %v132 = vmul.f32 %v100, %v100
    %v133 = vmul.f32 %v101, %v101
    %v134 = vmul.f32 %v102, %v102
    %v135 = vmul.f32 %v103, %v103
    %v136 = vmul.f32 %v104, %v104
    %v137 = vmul.f32 %v105, %v105
    %v138 = vmul.f32 %v106, %v106
    %v139 = vmul.f32 %v107, %v107
    %v140 = vmul.f32 %v108, %v108
    %v141 = vmul.f32 %v109, %v109
    %v142 = vmul.f32 %v110, %v110
    %v143 = vmul.f32 %v111, %v111
    %v144 = vmul.f32 %v112, %v112
    %v145 = vmul.f32 %v113, %v113
    %v146 = vmul.f32 %v114, %v114
    %v147 = vmul.f32 %v115, %v115
    %v148 = vmul.f32 %v116, %v116
    %v149 = vmul.f32 %v117, %v117
    %v150 = vmul.f32 %v118, %v118
    %v151 = vmul.f32 %v119, %v119
    %v152 = vadd.f32 %v120, %v136
    %v153 = vadd.f32 %v121, %v137
    %v154 = vadd.f32 %v122, %v138
    %v155 = vadd.f32 %v123, %v139
    %v156 = vadd.f32 %v124, %v140
    %v157 = vadd.f32 %v125, %v141
    %v158 = vadd.f32 %v126, %v142
    %v159 = vadd.f32 %v127, %v143
    %v160 = vadd.f32 %v128, %v144
    %v161 = vadd.f32 %v129, %v145
    %v162 = vadd.f32 %v130, %v146
    %v163 = vadd.f32 %v131, %v147
    %v164 = vadd.f32 %v132, %v148
    %v165 = vadd.f32 %v133, %v149
    %v166 = vadd.f32 %v134, %v150
    %v167 = vadd.f32 %v135, %v151
    %168 = vst [vmem:[#allocation8] sm:$0xff] %v152
    %169 = vst [vmem:[#allocation8 + $0x8] sm:$0xff] %v153
    %170 = vst [vmem:[#allocation8 + $0x10] sm:$0xff] %v154
    %171 = vst [vmem:[#allocation8 + $0x18] sm:$0xff] %v155
    %172 = vst [vmem:[#allocation8 + $0x20] sm:$0xff] %v156
    %173 = vst [vmem:[#allocation8 + $0x28] sm:$0xff] %v157
    %174 = vst [vmem:[#allocation8 + $0x30] sm:$0xff] %v158
    %175 = vst [vmem:[#allocation8 + $0x38] sm:$0xff] %v159
    %176 = vst [vmem:[#allocation8 + $0x40] sm:$0xff] %v160
    %177 = vst [vmem:[#allocation8 + $0x48] sm:$0xff] %v161
    %178 = vst [vmem:[#allocation8 + $0x50] sm:$0xff] %v162
    %179 = vst [vmem:[#allocation8 + $0x58] sm:$0xff] %v163
    %180 = vst [vmem:[#allocation8 + $0x60] sm:$0xff] %v164
    %181 = vst [vmem:[#allocation8 + $0x68] sm:$0xff] %v165
    %182 = vst [vmem:[#allocation8 + $0x70] sm:$0xff] %v166
    %183 = vst [vmem:[#allocation8 + $0x78] sm:$0xff] %v167
    // Predicated region
    $region26: #{tpu_custom_call.1} parent=1 // pred_check
      _
    $region27: #{tpu_custom_call.1} parent=1 // pred_check_branch
      %185 = sbr.rel (0) target = $region29
    $region28: #{tpu_custom_call.1} parent=1 // pred_region
      %s187 = ssub.s32 2048, 256
      %188 = vsyncadd [#allocation4], %s187
      %s189 = sshll.u32 [#allocation8], 4
      %s190 = int_to_ptr.vmem [resolvable:$true] %s189
      %195 = dma.vmem_to_hbm [thread:$0]  %s190, 256, %s3, [#allocation4], 256, 256, 16
    $region29: #{tpu_custom_call.1} parent=1 // pred_fallthru
      _
    // Predicated region
    $region30: #{tpu_custom_call.1} parent=1 // pred_check
      _
    $region31: #{tpu_custom_call.1} parent=1 // pred_check_branch
      %197 = sbr.rel (0) target = $region33
    $region32: #{tpu_custom_call.1} parent=1 // pred_region
      %198 = dma.done [#allocation4], 2048
    $region33: #{tpu_custom_call.1} parent=1 // pred_fallthru
      _
    %199 = vsyncpa [#allocation3], 1
    %200 = vsyncpa [#allocation6], 1
    %201 = vsyncpa [#allocation4], 1

</llo_original>
